<compile_context>
chip_gen: v6e
topology: v6e:2x2x1
jax: 0.10.0
libtpu: 0.0.40
codegen_flags: <defaults>
</compile_context>

<pallas_src>
import functools
import math
from functools import reduce
from operator import mul

import jax
import jax.numpy as jnp
from jax.experimental import pallas as pl
from jax.experimental.pallas import tpu as pltpu


def _sublane_tile(dtype) -> int:
    """Sublane tiling requirement for the second-to-last dim (8 f32, 16 bf16, 32 i8)."""
    itemsize = jnp.dtype(dtype).itemsize
    return 8 * max(1, 4 // itemsize)


def _tpu_hw_params():
    """Best-effort trace-time hardware query: (physical VMEM bytes, TensorCores/chip).

    Falls back to the conservative assumption (v7x-sized 64 MiB VMEM, 1 TC) if the
    query is unavailable — conservative for VMEM, and the 1-TC default avoids
    needlessly splitting the grid on v5e/v6e."""
    vmem_phys = 64 << 20
    num_tc = 1
    try:
        info = pltpu.get_tpu_info()
        v = getattr(info, "vmem_capacity_bytes", None)
        if v:
            vmem_phys = int(v)
        for attr in ("num_tensorcores", "tensorcores_per_chip", "num_cores"):
            c = getattr(info, attr, None)
            if c:
                num_tc = int(c)
                break
    except Exception:
        pass
    return vmem_phys, num_tc


def _pick_batch_tile(B, row_bytes, prompt_bytes, *, target_bytes, budget_bytes, num_tc):
    """Batch rows per grid step.

    Grows bt until the per-step block is roofline-sized (~target_bytes) or the
    double-buffered footprint hits budget_bytes.  Only on multi-TC chips (v7x)
    does it keep the grid at >= 2 (preferably even) steps so the 'parallel'
    batch axis can split across TensorCores."""
    bt_budget = max(1, (budget_bytes - 2 * prompt_bytes) // (2 * row_bytes))
    bt_target = max(1, -(-target_bytes // row_bytes))          # ceil
    bt = max(1, min(B, bt_budget, bt_target))
    if num_tc >= 2 and B >= 2:
        ns = -(-B // bt)                                        # ceil(B / bt)
        if ns < 2:
            ns = 2
        elif ns % 2:
            ns += 1                                             # even step count
        bt = max(1, -(-B // ns))
    return bt


def _vpt_kernel(x_ref, prompt_ref, o_ref, *, seq_len, unroll_rows=16):
    # x_ref:      (bt, x_seq_blk, D)  with x_seq_blk >= seq_len
    # prompt_ref: (vpt_len, D)        shared prompt, resident (constant index_map)
    # o_ref:      (bt, seq_len + vpt_len, D)
    bt = o_ref.shape[0]

    # Token slab: first seq_len tokens of each batch row.  When seq_len is not
    # sublane-aligned, the x block carries the full seq axis and this slice/store
    # is masked at the boundary — far cheaper than an extra XLA pre-slice pass.
    o_ref[:, :seq_len, :] = x_ref[:, :seq_len, :].astype(o_ref.dtype)

    # Prompt rows: store per batch row so we never materialize a (bt, vpt_len, D)
    # broadcast in vregs (which spills once bt is large).
    p = prompt_ref[...].astype(o_ref.dtype)
    if bt <= unroll_rows:
        for i in range(bt):
            o_ref[i, seq_len:, :] = p
    else:
        def body(i, carry):
            o_ref[i, seq_len:, :] = p
            return carry
        jax.lax.fori_loop(0, bt, body, 0)


def vpt_forward(x, prompt, seq_len):
    """VPT forward: concat(x[:, :seq_len, :], prompt broadcast over batch) along seq.

    x: [B, S_in, D] with S_in >= seq_len; prompt: [vpt_len, D]."""
    B, S_in, D = x.shape
    vpt_len, D2 = prompt.shape
    assert D == D2, "embedding dims of x and prompt must match"
    assert 0 < seq_len <= S_in
    out_len = seq_len + vpt_len
    # torch.cat-style promotion.  Note: bf16 x + f32 prompt promotes the whole
    # output to f32 (2x HBM write traffic) — cast the prompt beforehand if that
    # is not intended.
    out_dtype = jnp.result_type(x.dtype, prompt.dtype)

    # x block along seq: use exactly seq_len when it satisfies the sublane rule
    # (no tail read); otherwise take the full S_in axis (full dim is always
    # legal) and slice inside the kernel.  No XLA pre-slice in either case.
    sub = _sublane_tile(x.dtype)
    x_seq_blk = seq_len if (seq_len == S_in or seq_len % sub == 0) else S_in

    x_item = jnp.dtype(x.dtype).itemsize
    out_item = jnp.dtype(out_dtype).itemsize
    p_item = jnp.dtype(prompt.dtype).itemsize
    row_bytes = x_seq_blk * D * x_item + out_len * D * out_item   # in + out, per batch row
    prompt_bytes = vpt_len * D * p_item

    # Generation-aware VMEM budgets.
    vmem_phys, num_tc = _tpu_hw_params()
    if vmem_phys >= (96 << 20):            # v5e / v6e: 128 MiB physical VMEM
        budget_bytes, base_limit = 48 << 20, 64 << 20
    else:                                  # v7x: 64 MiB physical VMEM per TC
        budget_bytes, base_limit = 24 << 20, 32 << 20

    bt = _pick_batch_tile(B, row_bytes, prompt_bytes,
                          target_bytes=8 << 20,
                          budget_bytes=budget_bytes,
                          num_tc=num_tc)
    grid = (pl.cdiv(B, bt),)

    # Raise the scoped VMEM limit if even a single (double-buffered) batch tile
    # needs more than the base limit (huge rows), capped below physical VMEM.
    needed = 2 * bt * row_bytes + 2 * prompt_bytes + (2 << 20)
    vmem_limit = int(min(max(base_limit, needed),
                         max(base_limit, (vmem_phys * 9) // 10)))

    kernel = functools.partial(_vpt_kernel, seq_len=seq_len)

    return pl.pallas_call(
        kernel,
        out_shape=jax.ShapeDtypeStruct((B, out_len, D), out_dtype),
        grid_spec=pltpu.PrefetchScalarGridSpec(
            num_scalar_prefetch=0,
            grid=grid,
            in_specs=[
                # bt batch rows of x (seq axis either exactly seq_len, or full S_in).
                pl.BlockSpec((bt, x_seq_blk, D), lambda b: (b, 0, 0)),
                # Full prompt; constant index_map keeps it resident across grid steps.
                # (Tiny block — not worth risking pipeline_mode=pl.Buffered(1).)
                pl.BlockSpec((vpt_len, D), lambda b: (0, 0)),
            ],
            out_specs=pl.BlockSpec((bt, out_len, D), lambda b: (b, 0, 0)),
        ),
        compiler_params=pltpu.CompilerParams(
            dimension_semantics=("parallel",),
            vmem_limit_bytes=vmem_limit,
        ),
    )(x, prompt)


if __name__ == "__main__":
    # Module hyperparameters (small, TPU-tile-friendly).
    vpt_len = 8
    patch_size = (16, 16)
    emb_dim = 128

    key = jax.random.PRNGKey(0)
    k_prompt, k_x1, k_x2 = jax.random.split(key, 3)

    # Deterministic parameter init matching nn.init.uniform_(-v, v) with
    # v = sqrt(6 / (3 * prod(patch_size) + emb_dim)).
    init_val = math.sqrt(6.0 / float(3 * reduce(mul, patch_size, 1) + emb_dim))
    prompt = jax.random.uniform(
        k_prompt, (vpt_len, emb_dim), dtype=jnp.float32,
        minval=-init_val, maxval=init_val,
    )

    def reference(x, seq_len):
        return jnp.concatenate(
            [x[:, :seq_len, :],
             jnp.broadcast_to(prompt, (x.shape[0], vpt_len, emb_dim))],
            axis=1,
        )

    # Case 1: sublane-aligned seq_len (x block slices the seq axis exactly).
    B, S_in, seq_len = 2, 24, 16
    x = jax.random.normal(k_x1, (B, S_in, emb_dim), dtype=jnp.float32)
    out = jax.block_until_ready(vpt_forward(x, prompt, seq_len))
    assert out.shape == (B, seq_len + vpt_len, emb_dim)
    assert jnp.allclose(out, reference(x, seq_len)), "mismatch vs reference (aligned)"

    # Case 2: unaligned seq_len — exercises the in-kernel slice path (no XLA pre-slice).
    B, S_in, seq_len = 3, 24, 13
    x = jax.random.normal(k_x2, (B, S_in, emb_dim), dtype=jnp.float32)
    out = jax.block_until_ready(vpt_forward(x, prompt, seq_len))
    assert out.shape == (B, seq_len + vpt_len, emb_dim)
    assert jnp.allclose(out, reference(x, seq_len)), "mismatch vs reference (unaligned)"

    print("KERNEL_OK")
</pallas_src>

<mosaic_0001>
module attributes {stable_mosaic.version = 11 : i64} {
  func.func @_vpt_kernel(%arg0: i32, %arg1: memref<2x16x128xf32, #tpu.memory_space<vmem>>, %arg2: memref<8x128xf32, #tpu.memory_space<vmem>>, %arg3: memref<2x24x128xf32, #tpu.memory_space<vmem>>) attributes {dimension_semantics = [#tpu.dimension_semantics<parallel>], iteration_bounds = array<i64: 1>, scalar_prefetch = 0 : i64, scratch_operands = 0 : i64, tpu.core_type = #tpu.core_type<tc>, window_params = [{transform_indices = @transform_0, window_bounds = array<i64: 2, 16, 128>}, {pipeline_mode = #tpu.pipeline_mode<synchronous>, transform_indices = @transform_1, window_bounds = array<i64: 8, 128>}, {transform_indices = @transform_2, window_bounds = array<i64: 2, 24, 128>}]} {
    %c0 = arith.constant 0 : index
    %c0_0 = arith.constant 0 : index
    %c0_1 = arith.constant 0 : index
    %0 = vector.load %arg1[%c0, %c0_0, %c0_1] : memref<2x16x128xf32, #tpu.memory_space<vmem>>, vector<2x16x128xf32>
    %c0_2 = arith.constant 0 : index
    %c0_3 = arith.constant 0 : index
    %c0_4 = arith.constant 0 : index
    %1 = vector.load %arg3[%c0_2, %c0_3, %c0_4] : memref<2x24x128xf32, #tpu.memory_space<vmem>>, vector<2x16x128xf32>
    tpu.vector_store %arg3[%c0_2, %c0_3, %c0_4], %0 {strides = array<i32>} : memref<2x24x128xf32, #tpu.memory_space<vmem>>, vector<2x16x128xf32>,
    %c0_5 = arith.constant 0 : index
    %c0_6 = arith.constant 0 : index
    %2 = vector.load %arg2[%c0_5, %c0_6] : memref<8x128xf32, #tpu.memory_space<vmem>>, vector<8x128xf32>
    %c0_7 = arith.constant 0 : index
    %c16 = arith.constant 16 : index
    %c0_8 = arith.constant 0 : index
    %3 = vector.load %arg3[%c0_7, %c16, %c0_8] : memref<2x24x128xf32, #tpu.memory_space<vmem>>, vector<1x8x128xf32>
    %4 = vector.shape_cast %3 : vector<1x8x128xf32> to vector<8x128xf32>
    %5 = vector.shape_cast %2 : vector<8x128xf32> to vector<1x8x128xf32>
    tpu.vector_store %arg3[%c0_7, %c16, %c0_8], %5 {strides = array<i32>} : memref<2x24x128xf32, #tpu.memory_space<vmem>>, vector<1x8x128xf32>,
    %c1 = arith.constant 1 : index
    %c16_9 = arith.constant 16 : index
    %c0_10 = arith.constant 0 : index
    %6 = vector.load %arg3[%c1, %c16_9, %c0_10] : memref<2x24x128xf32, #tpu.memory_space<vmem>>, vector<1x8x128xf32>
    %7 = vector.shape_cast %6 : vector<1x8x128xf32> to vector<8x128xf32>
    %8 = vector.shape_cast %2 : vector<8x128xf32> to vector<1x8x128xf32>
    tpu.vector_store %arg3[%c1, %c16_9, %c0_10], %8 {strides = array<i32>} : memref<2x24x128xf32, #tpu.memory_space<vmem>>, vector<1x8x128xf32>,
    return
  }
  func.func @transform_0(%arg0: i32) -> (i32, i32, i32) {
    %c0_i32 = arith.constant 0 : i32
    %c0_i32_0 = arith.constant 0 : i32
    %c0_i32_1 = arith.constant 0 : i32
    return %arg0, %c0_i32, %c0_i32_0 : i32, i32, i32
  }
  func.func @transform_1(%arg0: i32) -> (i32, i32) {
    %c0_i32 = arith.constant 0 : i32
    %c0_i32_0 = arith.constant 0 : i32
    %c0_i32_1 = arith.constant 0 : i32
    return %c0_i32, %c0_i32_0 : i32, i32
  }
  func.func @transform_2(%arg0: i32) -> (i32, i32, i32) {
    %c0_i32 = arith.constant 0 : i32
    %c0_i32_0 = arith.constant 0 : i32
    %c0_i32_1 = arith.constant 0 : i32
    return %arg0, %c0_i32, %c0_i32_0 : i32, i32, i32
  }
}

</mosaic_0001>

<llo_original>
// kernel: tpu_custom_call.1
$region0: #{tpu_custom_call.1}
  #allocation0 [shape = 'u32[]', space=smem, size = 0x4, offset = 0x4, fixed_abs, tag = 'smem constant byte address 0x4 - core index']
  #allocation1 [shape = 'u32[144,128]{1,0:T(1,128)}', space=vmem, size = 0x12000, scoped, tag = 'internal scratch']
  #allocation8 [shape = 's32[]', space=sflag, size = 0x4, offset = 0, fixed_abs, tag = 'sflag constant byte address 0x0 - dummy sync flag']
  %s0 = inlined_call_operand.hbm [shape: f32[2,24,128], index: 0, kind: input, shape index: {}]
  %s1 = inlined_call_operand.hbm [shape: f32[8,128], index: 1, kind: input, shape index: {}]
  %s2 = inlined_call_operand.hbm [shape: f32[2,24,128], index: 2, kind: output, shape index: {}]
  %s3 = sld [smem:[#allocation0]]
  $region26: #{tpu_custom_call.1} parent=0
    _
  %s5 = ssub.s32 1, %s3
  %s6 = scalar_select 0, %s5, %s3
  $region1: #{tpu_custom_call.1} parent=0
    #allocation2 [shape = 'u8[16384]{0}', space=vmem, size = 0x4000, scoped, tag = 'input window, operand 0, single buffered']
    #allocation3 [shape = 's32[1]{0}', space=sflag, size = 0x4, scoped, tag = 'scoped memory for tpu_custom_call.1']
    #allocation4 [shape = 's32[1]{0}', space=sflag, size = 0x4, scoped, tag = 'scoped memory for tpu_custom_call.1']
    #allocation5 [shape = 'u8[4096]{0}', space=vmem, size = 0x1000, scoped, tag = 'input window, operand 1, single buffered']
    #allocation6 [shape = 's32[1]{0}', space=sflag, size = 0x4, scoped, tag = 'scoped memory for tpu_custom_call.1']
    #allocation7 [shape = 'u8[24576]{0}', space=vmem, size = 0x6000, scoped, tag = 'output window, operand 0, single buffered']
    %7 = vsyncpa [#allocation3], 0
    %8 = vsyncpa [#allocation6], 0
    %9 = vsyncpa [#allocation4], 0
    // Predicated region
    $region2: #{tpu_custom_call.1} parent=1 // pred_check
      _
    $region3: #{tpu_custom_call.1} parent=1 // pred_check_branch
      %11 = sbr.rel (0) target = $region5
    $region4: #{tpu_custom_call.1} parent=1 // pred_region
      #allocation9 [shape = 'u32[6]{0}', space=smem, size = 0x18, scoped, tag = 'DMA stride descriptor']
      %s13 = ssub.s32 512, 512
      %14 = vsyncadd [#allocation3], %s13
      %s16 = sshll.u32 1, 14
      %s17 = sxor.u32 4294967295, %s16
      %s19 = sld [smem:[#allocation0]]
      %s20 = sadd.s32 2, %s19
      %s22 = sshll.u32 7, 26
      %s23 = sxor.u32 4294967295, %s22
      %s24 = sand.u32 0, %s23
      %s25 = sshll.u32 %s20, 26
      %s26 = sor.u32 %s24, %s25
      %s27 = sshll.u32 [#allocation2], 4
      %s28 = int_to_ptr.vmem [resolvable:$true] %s27
      %34 = sst [smem:[#allocation9]] 384
      %s35 = scalar_lea.smem [#allocation9], 1
      %36 = sst [smem:[%s35]] 256
      %s37 = scalar_lea.smem [#allocation9], 2
      %38 = sst [smem:[%s37]] 2
      %s39 = scalar_lea.smem [#allocation9], 3
      %40 = sst [smem:[%s39]] 128
      %s41 = scalar_lea.smem [#allocation9], 4
      %42 = sst [smem:[%s41]] 128
      %s43 = scalar_lea.smem [#allocation9], 5
      %44 = sst [smem:[%s43]] 8
      %46 = dma.general %s0, 512, %s28, [#allocation3], 131072, [#allocation9], %s26, 0
    $region5: #{tpu_custom_call.1} parent=1 // pred_fallthru
      _
    // Predicated region
    $region6: #{tpu_custom_call.1} parent=1 // pred_check
      _
    $region7: #{tpu_custom_call.1} parent=1 // pred_check_branch
      %48 = sbr.rel (0) target = $region9
    $region8: #{tpu_custom_call.1} parent=1 // pred_region
      %s50 = ssub.s32 128, 128
      %51 = vsyncadd [#allocation6], %s50
      %s53 = sshll.u32 [#allocation5], 4
      %s54 = int_to_ptr.vmem [resolvable:$true] %s53
      %56 = dma.hbm_to_vmem [thread:$0]  %s1, 128, %s54, [#allocation6]
    $region9: #{tpu_custom_call.1} parent=1 // pred_fallthru
      _
    // Predicated region
    $region10: #{tpu_custom_call.1} parent=1 // pred_check
      _
    $region11: #{tpu_custom_call.1} parent=1 // pred_check_branch
      %58 = sbr.rel (0) target = $region13
    $region12: #{tpu_custom_call.1} parent=1 // pred_region
      %59 = dma.done [#allocation3], 512
    $region13: #{tpu_custom_call.1} parent=1 // pred_fallthru
      _
    // Predicated region
    $region14: #{tpu_custom_call.1} parent=1 // pred_check
      _
    $region15: #{tpu_custom_call.1} parent=1 // pred_check_branch
      %61 = sbr.rel (0) target = $region17
    $region16: #{tpu_custom_call.1} parent=1 // pred_region
      %62 = dma.done [#allocation6], 128
    $region17: #{tpu_custom_call.1} parent=1 // pred_fallthru
      _
    %v63 = vld [vmem:[#allocation2] sm:$0xff]
    %v64 = vld [vmem:[#allocation2 + $0x8] sm:$0xff]
    %v65 = vld [vmem:[#allocation2 + $0x10] sm:$0xff]
    %v66 = vld [vmem:[#allocation2 + $0x18] sm:$0xff]
    %67 = vst [vmem:[#allocation7] sm:$0xff] %v63
    %68 = vst [vmem:[#allocation7 + $0x8] sm:$0xff] %v64
    %69 = vst [vmem:[#allocation7 + $0x18] sm:$0xff] %v65
    %70 = vst [vmem:[#allocation7 + $0x20] sm:$0xff] %v66
    %v71 = vld [vmem:[#allocation5] sm:$0xff]
    %72 = vst [vmem:[#allocation7 + $0x10] sm:$0xff] %v71
    %s73 = scalar_lea.vmem [#allocation7], 24
    %74 = vst [vmem:[%s73 + $0x10] sm:$0xff] %v71
    // Predicated region
    $region18: #{tpu_custom_call.1} parent=1 // pred_check
      _
    $region19: #{tpu_custom_call.1} parent=1 // pred_check_branch
      %76 = sbr.rel (0) target = $region21
    $region20: #{tpu_custom_call.1} parent=1 // pred_region
      %s78 = ssub.s32 768, 768
      %79 = vsyncadd [#allocation4], %s78
      %s80 = sshll.u32 [#allocation7], 4
      %s81 = int_to_ptr.vmem [resolvable:$true] %s80
      %86 = dma.vmem_to_hbm [thread:$0]  %s81, 768, %s2, [#allocation4], 128, 128, 8
    $region21: #{tpu_custom_call.1} parent=1 // pred_fallthru
      _
    // Predicated region
    $region22: #{tpu_custom_call.1} parent=1 // pred_check
      _
    $region23: #{tpu_custom_call.1} parent=1 // pred_check_branch
      %88 = sbr.rel (0) target = $region25
    $region24: #{tpu_custom_call.1} parent=1 // pred_region
      %89 = dma.done [#allocation4], 768
    $region25: #{tpu_custom_call.1} parent=1 // pred_fallthru
      _
    %90 = vsyncpa [#allocation3], 1
    %91 = vsyncpa [#allocation6], 1
    %92 = vsyncpa [#allocation4], 1

</llo_original>
